<compile_context>
chip_gen: v7x
topology: tpu7x:2x2x1
jax: 0.10.0
libtpu: 0.0.40
codegen_flags: <defaults>
</compile_context>

<pallas_src>
import functools

import jax
import jax.numpy as jnp
from jax import lax
from jax.experimental import pallas as pl
from jax.experimental.pallas import tpu as pltpu

# "NT" dimension numbers: contract the minor dim of both operands (A @ B^T).
_NT_DIMS = (((1,), (1,)), ((), ()))


def _mlp_kernel(x_ref, w1_ref, b1_ref, w2_ref, b2_ref, o_ref):
    """One row-tile of the 2-layer MLP.

    x_ref : (TILE_N, 27)  input rows
    w1_ref: (27, 10)      layer-1 weight stored (in, out)  (== torch weight.T)
    b1_ref: (1, 10)       layer-1 bias
    w2_ref: (1, 10)       layer-2 weight in torch (out, in) layout
    b2_ref: (1, 1)        layer-2 bias
    o_ref : (1, TILE_N)   lane-dense output row (transposed w.r.t. torch (N,1))
    """
    x = x_ref[...]
    # Layer 1 on the MXU: (TILE_N, 27) @ (27, 10) -> (TILE_N, 10).
    # Default TPU matmul precision => single-pass bf16 MXU inputs, f32 accum
    # (matches the pure-JAX reference; avoids multi-pass f32 push cadence).
    h = jnp.dot(x, w1_ref[...], preferred_element_type=jnp.float32) + b1_ref[...]
    h = jnp.maximum(h, 0.0)  # ReLU
    # Layer 2 as an NT matmul: (1, 10) x (TILE_N, 10)^T -> (1, TILE_N).
    # Keeps the epilogue (bias add, tanh, store) lane-dense so EUP/vst do not
    # become the binding slot once the HBM side is pipelined.
    y = lax.dot_general(w2_ref[...], h, _NT_DIMS,
                        preferred_element_type=jnp.float32)
    o_ref[...] = jnp.tanh(y + b2_ref[...])


def _round_up(a: int, b: int) -> int:
    return ((a + b - 1) // b) * b


@functools.partial(jax.jit, static_argnames=("tile_n",))
def ttt_netx_forward(x, w1, b1, w2, b2, *, tile_n=8192):
    """x: (..., 3, 3, 3) or anything reshapeable to (-1, 27).

    w1: (27, 10) = torch layer1.weight.T   b1: (1, 10)
    w2: (1, 10)  = torch layer2.weight     b2: (1, 1)
    Returns (N, 1) float32 == torch tanh(layer2(relu(layer1(x)))).
    """
    x2 = x.reshape(-1, 27)
    if x2.dtype != jnp.float32:
        x2 = x2.astype(jnp.float32)
    n = x2.shape[0]

    # Don't over-pad tiny batches, but keep the tile a multiple of 128 so the
    # (1, tile_n) output store stays unmasked and vreg-aligned.
    tile_n = min(tile_n, _round_up(max(n, 1), 128))
    n_pad = _round_up(n, tile_n)
    if n_pad != n:
        x2 = jnp.pad(x2, ((0, n_pad - n), (0, 0)))
    num_tiles = n_pad // tile_n

    # VMEM budget: x tile is lane-padded 27 -> 128 by the DMA layout
    # (tile_n * 128 * 4 B per buffer, double-buffered), plus the (tile_n, 10)
    # hidden intermediate (also lane-padded) and small resident weights/output.
    # Cap at 48 MiB so it always fits v7x's 64 MiB/TC while comfortably lifting
    # v5e's 16 MiB default scoped limit for large tiles.
    x_buf_bytes = tile_n * 128 * 4
    vmem_limit = min(4 * x_buf_bytes + (16 << 20), 48 << 20)

    flops = 2 * n_pad * (27 * 10 + 10)                       # both matmuls
    bytes_accessed = n_pad * (27 + 1) * 4 + (27 * 10 + 10 + 10 + 1) * 4

    out = pl.pallas_call(
        _mlp_kernel,
        out_shape=jax.ShapeDtypeStruct((1, n_pad), jnp.float32),
        grid_spec=pltpu.PrefetchScalarGridSpec(
            num_scalar_prefetch=0,
            grid=(num_tiles,),
            in_specs=[
                pl.BlockSpec((tile_n, 27), lambda i: (i, 0)),  # x: row tile
                pl.BlockSpec((27, 10), lambda i: (0, 0)),      # W1: resident
                pl.BlockSpec((1, 10), lambda i: (0, 0)),       # b1: resident
                pl.BlockSpec((1, 10), lambda i: (0, 0)),       # W2: resident
                pl.BlockSpec((1, 1), lambda i: (0, 0)),        # b2: resident
            ],
            out_specs=pl.BlockSpec((1, tile_n), lambda i: (0, i)),
        ),
        compiler_params=pltpu.CompilerParams(
            dimension_semantics=("parallel",),   # megacore-shard rows on v7x
            vmem_limit_bytes=vmem_limit,
        ),
        cost_estimate=pl.CostEstimate(
            flops=flops, transcendentals=n_pad, bytes_accessed=bytes_accessed),
    )(x2, w1, b1, w2, b2)

    # (1, n_pad) flattened row-major is exactly the per-row outputs in order.
    return out.reshape(n_pad, 1)[:n]


def init_params(key):
    """PyTorch-nn.Linear-style uniform init with the layouts the kernel expects.
    layer1: Linear(27, 10) -> w1 (27, 10) [== torch weight.T], b1 (1, 10)
    layer2: Linear(10, 1)  -> w2 (1, 10)  [torch (out, in)],   b2 (1, 1)
    """
    k1, k2, k3, k4 = jax.random.split(key, 4)
    lim1 = 1.0 / jnp.sqrt(27.0)
    lim2 = 1.0 / jnp.sqrt(10.0)
    w1 = jax.random.uniform(k1, (27, 10), jnp.float32, -lim1, lim1)
    b1 = jax.random.uniform(k2, (1, 10), jnp.float32, -lim1, lim1)
    w2 = jax.random.uniform(k3, (1, 10), jnp.float32, -lim2, lim2)
    b2 = jax.random.uniform(k4, (1, 1), jnp.float32, -lim2, lim2)
    return w1, b1, w2, b2


if __name__ == "__main__":
    key = jax.random.PRNGKey(0)
    kx, kp = jax.random.split(key)

    # batch=8 inputs of shape (3, 3, 3), matching the 27-feature flatten.
    x = jax.random.normal(kx, (8, 3, 3, 3), jnp.float32)
    w1, b1, w2, b2 = init_params(kp)

    out = jax.block_until_ready(ttt_netx_forward(x, w1, b1, w2, b2))

    # Pure-JAX reference (same math outside Pallas).
    xf = x.reshape(-1, 27)
    ref = jnp.tanh(jnp.maximum(xf @ w1 + b1, 0.0) @ w2.T + b2)
    assert out.shape == (8, 1), out.shape
    assert jnp.allclose(out, ref, atol=2e-5, rtol=2e-5), float(
        jnp.max(jnp.abs(out - ref)))

    print("KERNEL_OK")
</pallas_src>

<mosaic_0001>
module attributes {stable_mosaic.version = 11 : i64} {
  func.func @_mlp_kernel(%arg0: i32, %arg1: memref<128x27xf32, #tpu.memory_space<vmem>>, %arg2: memref<27x10xf32, #tpu.memory_space<vmem>>, %arg3: memref<1x10xf32, #tpu.memory_space<vmem>>, %arg4: memref<1x10xf32, #tpu.memory_space<vmem>>, %arg5: memref<1x1xf32, #tpu.memory_space<vmem>>, %arg6: memref<1x128xf32, #tpu.memory_space<vmem>>) attributes {dimension_semantics = [#tpu.dimension_semantics<parallel>], iteration_bounds = array<i64: 1>, scalar_prefetch = 0 : i64, scratch_operands = 0 : i64, tpu.core_type = #tpu.core_type<tc>, window_params = [{transform_indices = @transform_0, window_bounds = array<i64: 128, 27>}, {pipeline_mode = #tpu.pipeline_mode<synchronous>, transform_indices = @transform_1, window_bounds = array<i64: 27, 10>}, {pipeline_mode = #tpu.pipeline_mode<synchronous>, transform_indices = @transform_2, window_bounds = array<i64: 1, 10>}, {pipeline_mode = #tpu.pipeline_mode<synchronous>, transform_indices = @transform_3, window_bounds = array<i64: 1, 10>}, {pipeline_mode = #tpu.pipeline_mode<synchronous>, transform_indices = @transform_4, window_bounds = array<i64: 1, 1>}, {transform_indices = @transform_5, window_bounds = array<i64: 1, 128>}]} {
    %c0 = arith.constant 0 : index
    %c0_0 = arith.constant 0 : index
    %0 = vector.load %arg1[%c0, %c0_0] : memref<128x27xf32, #tpu.memory_space<vmem>>, vector<128x27xf32>
    %c0_1 = arith.constant 0 : index
    %c0_2 = arith.constant 0 : index
    %1 = vector.load %arg2[%c0_1, %c0_2] : memref<27x10xf32, #tpu.memory_space<vmem>>, vector<27x10xf32>
    %cst = arith.constant dense<0.000000e+00> : vector<128x10xf32>
    %2 = tpu.matmul %0, %1, %cst {dimension_numbers = #tpu.dot_dimension_numbers<[1], [0], [0], [1], [0, 0, 1, 1], [], []>} : vector<128x27xf32>, vector<27x10xf32>, vector<128x10xf32> -> vector<128x10xf32>
    %c0_3 = arith.constant 0 : index
    %c0_4 = arith.constant 0 : index
    %3 = vector.load %arg3[%c0_3, %c0_4] : memref<1x10xf32, #tpu.memory_space<vmem>>, vector<1x10xf32>
    %4 = vector.broadcast %3 : vector<1x10xf32> to vector<128x10xf32>
    %5 = arith.addf %2, %4 : vector<128x10xf32>
    %cst_5 = arith.constant 0.000000e+00 : f32
    %6 = vector.broadcast %cst_5 : f32 to vector<128x10xf32>
    %7 = arith.maximumf %5, %6 : vector<128x10xf32>
    %c0_6 = arith.constant 0 : index
    %c0_7 = arith.constant 0 : index
    %8 = vector.load %arg4[%c0_6, %c0_7] : memref<1x10xf32, #tpu.memory_space<vmem>>, vector<1x10xf32>
    %cst_8 = arith.constant dense<0.000000e+00> : vector<1x128xf32>
    %9 = tpu.matmul %8, %7, %cst_8 {dimension_numbers = #tpu.dot_dimension_numbers<[1], [1], [0], [0], [0, 0, 1, 0], [], []>} : vector<1x10xf32>, vector<128x10xf32>, vector<1x128xf32> -> vector<1x128xf32>
    %c0_9 = arith.constant 0 : index
    %c0_10 = arith.constant 0 : index
    %10 = vector.load %arg5[%c0_9, %c0_10] : memref<1x1xf32, #tpu.memory_space<vmem>>, vector<1x1xf32>
    %11 = vector.broadcast %10 : vector<1x1xf32> to vector<1x128xf32>
    %12 = arith.addf %9, %11 : vector<1x128xf32>
    %13 = math.tanh %12 : vector<1x128xf32>
    %c0_11 = arith.constant 0 : index
    %c0_12 = arith.constant 0 : index
    %14 = vector.load %arg6[%c0_11, %c0_12] : memref<1x128xf32, #tpu.memory_space<vmem>>, vector<1x128xf32>
    tpu.vector_store %arg6[%c0_11, %c0_12], %13 {strides = array<i32>} : memref<1x128xf32, #tpu.memory_space<vmem>>, vector<1x128xf32>,
    return
  }
  func.func @transform_0(%arg0: i32) -> (i32, i32) {
    %c0_i32 = arith.constant 0 : i32
    %c0_i32_0 = arith.constant 0 : i32
    return %arg0, %c0_i32 : i32, i32
  }
  func.func @transform_1(%arg0: i32) -> (i32, i32) {
    %c0_i32 = arith.constant 0 : i32
    %c0_i32_0 = arith.constant 0 : i32
    %c0_i32_1 = arith.constant 0 : i32
    return %c0_i32, %c0_i32_0 : i32, i32
  }
  func.func @transform_2(%arg0: i32) -> (i32, i32) {
    %c0_i32 = arith.constant 0 : i32
    %c0_i32_0 = arith.constant 0 : i32
    %c0_i32_1 = arith.constant 0 : i32
    return %c0_i32, %c0_i32_0 : i32, i32
  }
  func.func @transform_3(%arg0: i32) -> (i32, i32) {
    %c0_i32 = arith.constant 0 : i32
    %c0_i32_0 = arith.constant 0 : i32
    %c0_i32_1 = arith.constant 0 : i32
    return %c0_i32, %c0_i32_0 : i32, i32
  }
  func.func @transform_4(%arg0: i32) -> (i32, i32) {
    %c0_i32 = arith.constant 0 : i32
    %c0_i32_0 = arith.constant 0 : i32
    %c0_i32_1 = arith.constant 0 : i32
    return %c0_i32, %c0_i32_0 : i32, i32
  }
  func.func @transform_5(%arg0: i32) -> (i32, i32) {
    %c0_i32 = arith.constant 0 : i32
    %c0_i32_0 = arith.constant 0 : i32
    return %c0_i32, %arg0 : i32, i32
  }
}

</mosaic_0001>

<llo_original>
// kernel: ttt_netx_forward.1
$region0: #{ttt_netx_forward.1}
  #allocation0 [shape = 'u32[]', space=smem, size = 0x4, offset = 0x4, fixed_abs, tag = 'smem constant byte address 0x4 - core index']
  #allocation1 [shape = 'u32[144,128]{1,0:T(1,128)}', space=vmem, size = 0x12000, scoped, tag = 'internal scratch']
  #allocation2 [shape = 'f32[1,1]{1,0:T(1,128)S(1)}', space=vmem, size = 0x200, scoped, tag = 'scoped memory for ttt_netx_forward.1']
  %s0 = inlined_call_operand.vmem [shape: f32[128,27], index: 0, kind: input, shape index: {}]
  %s1 = inlined_call_operand.vmem [shape: f32[27,10], index: 1, kind: input, shape index: {}]
  %s2 = inlined_call_operand.vmem [shape: f32[1,10], index: 2, kind: input, shape index: {}]
  %s3 = inlined_call_operand.vmem [shape: f32[1,10], index: 3, kind: input, shape index: {}]
  %s4 = inlined_call_operand.<no memory space> [shape: f32[1,1], index: 4, kind: input, shape index: {}]
  %s5 = inlined_call_operand.vmem [shape: f32[1,128], index: 5, kind: output, shape index: {}]
  %s6 = sld [smem:[#allocation0]]
  $region30: #{ttt_netx_forward.1} parent=0
    _
  %s8 = ssub.s32 1, %s6
  %s9 = scalar_select 0, %s8, %s6
  %v10 = vstv %s4
  %11 = vst [vmem:[#allocation2] sm:$0x1] %v10
  // Predicated region
  $region2: #{ttt_netx_forward.1} parent=0 // pred_check
    _
  $region3: #{ttt_netx_forward.1} parent=0 // pred_check_branch
    %13 = sbr.rel (0) target = $region5
  $region4: #{ttt_netx_forward.1} parent=0 // pred_region
    _
  $region5: #{ttt_netx_forward.1} parent=0 // pred_fallthru
    _
  // Predicated region
  $region6: #{ttt_netx_forward.1} parent=0 // pred_check
    _
  $region7: #{ttt_netx_forward.1} parent=0 // pred_check_branch
    %15 = sbr.rel (0) target = $region9
  $region8: #{ttt_netx_forward.1} parent=0 // pred_region
    _
  $region9: #{ttt_netx_forward.1} parent=0 // pred_fallthru
    _
  // Predicated region
  $region10: #{ttt_netx_forward.1} parent=0 // pred_check
    _
  $region11: #{ttt_netx_forward.1} parent=0 // pred_check_branch
    %17 = sbr.rel (0) target = $region13
  $region12: #{ttt_netx_forward.1} parent=0 // pred_region
    _
  $region13: #{ttt_netx_forward.1} parent=0 // pred_fallthru
    _
  // Predicated region
  $region14: #{ttt_netx_forward.1} parent=0 // pred_check
    _
  $region15: #{ttt_netx_forward.1} parent=0 // pred_check_branch
    %19 = sbr.rel (0) target = $region17
  $region16: #{ttt_netx_forward.1} parent=0 // pred_region
    _
  $region17: #{ttt_netx_forward.1} parent=0 // pred_fallthru
    _
  // Predicated region
  $region18: #{ttt_netx_forward.1} parent=0 // pred_check
    _
  $region19: #{ttt_netx_forward.1} parent=0 // pred_check_branch
    %21 = sbr.rel (0) target = $region21
  $region20: #{ttt_netx_forward.1} parent=0 // pred_region
    _
  $region21: #{ttt_netx_forward.1} parent=0 // pred_fallthru
    _
  %v22 = vld [vmem:[%s0] sm:$0xff]
  %v23 = vld [vmem:[%s0 + $0x8] sm:$0xff]
  %v24 = vld [vmem:[%s0 + $0x10] sm:$0xff]
  %v25 = vld [vmem:[%s0 + $0x18] sm:$0xff]
  %v26 = vld [vmem:[%s0 + $0x20] sm:$0xff]
  %v27 = vld [vmem:[%s0 + $0x28] sm:$0xff]
  %v28 = vld [vmem:[%s0 + $0x30] sm:$0xff]
  %v29 = vld [vmem:[%s0 + $0x38] sm:$0xff]
  %v30 = vld [vmem:[%s0 + $0x40] sm:$0xff]
  %v31 = vld [vmem:[%s0 + $0x48] sm:$0xff]
  %v32 = vld [vmem:[%s0 + $0x50] sm:$0xff]
  %v33 = vld [vmem:[%s0 + $0x58] sm:$0xff]
  %v34 = vld [vmem:[%s0 + $0x60] sm:$0xff]
  %v35 = vld [vmem:[%s0 + $0x68] sm:$0xff]
  %v36 = vld [vmem:[%s0 + $0x70] sm:$0xff]
  %v37 = vld [vmem:[%s0 + $0x78] sm:$0xff]
  %v38 = vld [vmem:[%s1] sm:$0xff]
  %v39 = vld [vmem:[%s1 + $0x8] sm:$0xff]
  %v40 = vld [vmem:[%s1 + $0x10] sm:$0xff]
  %v41 = vld [vmem:[%s1 + $0x18] sm:$0x7]
  %v42 = vld [vmem:[%s2] sm:$0x1]
  %v44 = vlaneseq
  %v45 = vshrl.u32 %v44, 7
  %v46 = vsub.s32 0, %v45
  %v47 = vrot.slane %v42, %v46
  %vm49 = vcmask 220160
  %v51 = vsel %vm49, %v22, 0
  %v54 = vsel %vm49, %v23, 0
  %v57 = vsel %vm49, %v24, 0
  %v60 = vsel %vm49, %v25, 0
  %v63 = vsel %vm49, %v26, 0
  %v66 = vsel %vm49, %v27, 0
  %v69 = vsel %vm49, %v28, 0
  %v72 = vsel %vm49, %v29, 0
  %v75 = vsel %vm49, %v30, 0
  %v78 = vsel %vm49, %v31, 0
  %v81 = vsel %vm49, %v32, 0
  %v84 = vsel %vm49, %v33, 0
  %v87 = vsel %vm49, %v34, 0
  %v90 = vsel %vm49, %v35, 0
  %v93 = vsel %vm49, %v36, 0
  %v96 = vsel %vm49, %v37, 0
  %vm98 = vcmask 1042432
  %v100 = vsel %vm98, %v41, 0
  %102 = vmatprep.subr.mxu0 0.0
  %103 = vmatpush1.msra.mxu0 %v38
  %104 = vmatprep.subr.mxu0 0.0
  %105 = vmatpush1.msra.mxu0 %v39
  %106 = vmatprep.subr.mxu0 0.0
  %107 = vmatpush1.msra.mxu0 %v40
  %108 = vmatprep.subr.mxu0 0.0
  %109 = vmatpush1.msra.mxu0 %v100
  %110 = vmatprep.subr.mxu0 0.0
  %111 = vmatpush1.msra.mxu0 0.0
  %112 = vmatprep.subr.mxu0 0.0
  %113 = vmatpush1.msra.mxu0 0.0
  %114 = vmatprep.subr.mxu0 0.0
  %115 = vmatpush1.msra.mxu0 0.0
  %116 = vmatprep.subr.mxu0 0.0
  %117 = vmatpush1.msra.mxu0 0.0
  %118 = vmatprep.subr.mxu0 0.0
  %119 = vmatpush1.msra.mxu0 0.0
  %120 = vmatprep.subr.mxu0 0.0
  %121 = vmatpush1.msra.mxu0 0.0
  %122 = vmatprep.subr.mxu0 0.0
  %123 = vmatpush1.msra.mxu0 0.0
  %124 = vmatprep.subr.mxu0 0.0
  %125 = vmatpush1.msra.mxu0 0.0
  %126 = vmatprep.subr.mxu0 0.0
  %127 = vmatpush1.msra.mxu0 0.0
  %128 = vmatprep.subr.mxu0 0.0
  %129 = vmatpush1.msra.mxu0 0.0
  %130 = vmatprep.subr.mxu0 0.0
  %131 = vmatpush1.msra.mxu0 0.0
  %132 = vmatprep.subr.mxu0 0.0
  %133 = vmatpush1.msra.mxu0 0.0
  %134 = vmatprep.subr.mxu0 0.0
  %135 = vmatpush1.msra.mxu0 0.0
  %136 = vmatprep.subr.mxu0 0.0
  %137 = vmatpush1.msra.mxu0 0.0
  %138 = vmatprep.subr.mxu0 0.0
  %139 = vmatpush1.msra.mxu0 0.0
  %140 = vmatprep.subr.mxu0 0.0
  %141 = vmatpush1.msra.mxu0 0.0
  %142 = vmatprep.subr.mxu0 0.0
  %143 = vmatpush1.msra.mxu0 0.0
  %144 = vmatprep.subr.mxu0 0.0
  %145 = vmatpush1.msra.mxu0 0.0
  %146 = vmatprep.subr.mxu0 0.0
  %147 = vmatpush1.msra.mxu0 0.0
  %148 = vmatprep.subr.mxu0 0.0
  %149 = vmatpush1.msra.mxu0 0.0
  %150 = vmatprep.subr.mxu0 0.0
  %151 = vmatpush1.msra.mxu0 0.0
  %152 = vmatprep.subr.mxu0 0.0
  %153 = vmatpush1.msra.mxu0 0.0
  %154 = vmatprep.subr.mxu0 0.0
  %155 = vmatpush1.msra.mxu0 0.0
  %156 = vmatprep.subr.mxu0 0.0
  %157 = vmatpush1.msra.mxu0 0.0
  %158 = vmatprep.subr.mxu0 0.0
  %159 = vmatpush1.msra.mxu0 0.0
  %160 = vmatprep.subr.mxu0 0.0
  %161 = vmatpush1.msra.mxu0 0.0
  %162 = vmatprep.subr.mxu0 0.0
  %163 = vmatpush1.msra.mxu0 0.0
  %164 = vmatprep.subr.mxu0 0.0
  %165 = vmatpush1.msra.mxu0 0.0
  %166 = vmatprep.mubr.f32.mxu0 0.0
  %167 = vmatmul.mubr.f32.gmra.mrb[0].mxu0 %v51
  %v168 = vpop.f32.mrb[0].mxu0
  %v169 = vadd.f32 %v47, %v168
  %v170 = vpop.f32.mrb[0].mxu0
  %171 = vmatprep.mubr.f32.mxu0 0.0
  %172 = vmatmul.mubr.f32.gmra.mrb[0].mxu0 %v54
  %v173 = vpop.f32.mrb[0].mxu0
  %v174 = vadd.f32 %v47, %v173
  %v175 = vpop.f32.mrb[0].mxu0
  %176 = vmatprep.mubr.f32.mxu0 0.0
  %177 = vmatmul.mubr.f32.gmra.mrb[0].mxu0 %v57
  %v178 = vpop.f32.mrb[0].mxu0
  %v179 = vadd.f32 %v47, %v178
  %v180 = vpop.f32.mrb[0].mxu0
  %181 = vmatprep.mubr.f32.mxu0 0.0
  %182 = vmatmul.mubr.f32.gmra.mrb[0].mxu0 %v60
  %v183 = vpop.f32.mrb[0].mxu0
  %v184 = vadd.f32 %v47, %v183
  %v185 = vpop.f32.mrb[0].mxu0
  %186 = vmatprep.mubr.f32.mxu0 0.0
  %187 = vmatmul.mubr.f32.gmra.mrb[0].mxu0 %v63
  %v188 = vpop.f32.mrb[0].mxu0
  %v189 = vadd.f32 %v47, %v188
  %v190 = vpop.f32.mrb[0].mxu0
  %191 = vmatprep.mubr.f32.mxu0 0.0
  %192 = vmatmul.mubr.f32.gmra.mrb[0].mxu0 %v66
  %v193 = vpop.f32.mrb[0].mxu0
  %v194 = vadd.f32 %v47, %v193
  %v195 = vpop.f32.mrb[0].mxu0
  %196 = vmatprep.mubr.f32.mxu0 0.0
  %197 = vmatmul.mubr.f32.gmra.mrb[0].mxu0 %v69
  %v198 = vpop.f32.mrb[0].mxu0
  %v199 = vadd.f32 %v47, %v198
  %v200 = vpop.f32.mrb[0].mxu0
  %201 = vmatprep.mubr.f32.mxu0 0.0
  %202 = vmatmul.mubr.f32.gmra.mrb[0].mxu0 %v72
  %v203 = vpop.f32.mrb[0].mxu0
  %v204 = vadd.f32 %v47, %v203
  %v205 = vpop.f32.mrb[0].mxu0
  %206 = vmatprep.mubr.f32.mxu0 0.0
  %207 = vmatmul.mubr.f32.gmra.mrb[0].mxu0 %v75
  %v208 = vpop.f32.mrb[0].mxu0
  %v209 = vadd.f32 %v47, %v208
  %v210 = vpop.f32.mrb[0].mxu0
  %211 = vmatprep.mubr.f32.mxu0 0.0
  %212 = vmatmul.mubr.f32.gmra.mrb[0].mxu0 %v78
  %v213 = vpop.f32.mrb[0].mxu0
  %v214 = vadd.f32 %v47, %v213
  %v215 = vpop.f32.mrb[0].mxu0
  %216 = vmatprep.mubr.f32.mxu0 0.0
  %217 = vmatmul.mubr.f32.gmra.mrb[0].mxu0 %v81
  %v218 = vpop.f32.mrb[0].mxu0
  %v219 = vadd.f32 %v47, %v218
  %v220 = vpop.f32.mrb[0].mxu0
  %221 = vmatprep.mubr.f32.mxu0 0.0
  %222 = vmatmul.mubr.f32.gmra.mrb[0].mxu0 %v84
  %v223 = vpop.f32.mrb[0].mxu0
  %v224 = vadd.f32 %v47, %v223
  %v225 = vpop.f32.mrb[0].mxu0
  %226 = vmatprep.mubr.f32.mxu0 0.0
  %227 = vmatmul.mubr.f32.gmra.mrb[0].mxu0 %v87
  %v228 = vpop.f32.mrb[0].mxu0
  %v229 = vadd.f32 %v47, %v228
  %v230 = vpop.f32.mrb[0].mxu0
  %231 = vmatprep.mubr.f32.mxu0 0.0
  %232 = vmatmul.mubr.f32.gmra.mrb[0].mxu0 %v90
  %v233 = vpop.f32.mrb[0].mxu0
  %v234 = vadd.f32 %v47, %v233
  %v235 = vpop.f32.mrb[0].mxu0
  %236 = vmatprep.mubr.f32.mxu0 0.0
  %237 = vmatmul.mubr.f32.gmra.mrb[0].mxu0 %v93
  %v238 = vpop.f32.mrb[0].mxu0
  %v239 = vadd.f32 %v47, %v238
  %v240 = vpop.f32.mrb[0].mxu0
  %241 = vmatprep.mubr.f32.mxu0 0.0
  %242 = vmatmul.mubr.f32.gmra.mrb[0].mxu0 %v96
  %v243 = vpop.f32.mrb[0].mxu0
  %v244 = vadd.f32 %v47, %v243
  %v245 = vpop.f32.mrb[0].mxu0
  %246 = vdwg.mxu0
  %v247 = vmax.f32 %v169, 0.0
  %v248 = vmax.f32 %v174, 0.0
  %v249 = vmax.f32 %v179, 0.0
  %v250 = vmax.f32 %v184, 0.0
  %v251 = vmax.f32 %v189, 0.0
  %v252 = vmax.f32 %v194, 0.0
  %v253 = vmax.f32 %v199, 0.0
  %v254 = vmax.f32 %v204, 0.0
  %v255 = vmax.f32 %v209, 0.0
  %v256 = vmax.f32 %v214, 0.0
  %v257 = vmax.f32 %v219, 0.0
  %v258 = vmax.f32 %v224, 0.0
  %v259 = vmax.f32 %v229, 0.0
  %v260 = vmax.f32 %v234, 0.0
  %v261 = vmax.f32 %v239, 0.0
  %v262 = vmax.f32 %v244, 0.0
  %v263 = vld [vmem:[%s3] sm:$0x1]
  %v264 = vld [vmem:[#allocation2] sm:$0x1]
  %266 = vset.pattern.permute.xlu0 0
  %267 = vperm.xlu0 %266, %v264
  %v268 = vpop.permute.xlu0 %267
  %v270 = vlaneseq
  %v271 = vshrl.u32 %v270, 7
  %v272 = vsub.s32 0, %v271
  %v273 = vrot.slane %v268, %v272
  %vm274 = vcmask 80896
  %v276 = vsel %vm274, %v263, 0
  %v279 = vsel %vm274, %v247, 0
  %v282 = vsel %vm274, %v248, 0
  %v285 = vsel %vm274, %v249, 0
  %v288 = vsel %vm274, %v250, 0
  %v291 = vsel %vm274, %v251, 0
  %v294 = vsel %vm274, %v252, 0
  %v297 = vsel %vm274, %v253, 0
  %v300 = vsel %vm274, %v254, 0
  %v303 = vsel %vm274, %v255, 0
  %v306 = vsel %vm274, %v256, 0
  %v309 = vsel %vm274, %v257, 0
  %v312 = vsel %vm274, %v258, 0
  %v315 = vsel %vm274, %v259, 0
  %v318 = vsel %vm274, %v260, 0
  %v321 = vsel %vm274, %v261, 0
  %v324 = vsel %vm274, %v262, 0
  %326 = vmatprep.subr.mxu0 0.0
  %327 = vmatpush1.xpose.msra.mxu0 %v279
  %328 = vmatprep.subr.mxu0 0.0
  %329 = vmatpush1.xpose.msra.mxu0 %v282
  %330 = vmatprep.subr.mxu0 0.0
  %331 = vmatpush1.xpose.msra.mxu0 %v285
  %332 = vmatprep.subr.mxu0 0.0
  %333 = vmatpush1.xpose.msra.mxu0 %v288
  %334 = vmatprep.subr.mxu0 0.0
  %335 = vmatpush1.xpose.msra.mxu0 %v291
  %336 = vmatprep.subr.mxu0 0.0
  %337 = vmatpush1.xpose.msra.mxu0 %v294
  %338 = vmatprep.subr.mxu0 0.0
  %339 = vmatpush1.xpose.msra.mxu0 %v297
  %340 = vmatprep.subr.mxu0 0.0
  %341 = vmatpush1.xpose.msra.mxu0 %v300
  %342 = vmatprep.subr.mxu0 0.0
  %343 = vmatpush1.xpose.msra.mxu0 %v303
  %344 = vmatprep.subr.mxu0 0.0
  %345 = vmatpush1.xpose.msra.mxu0 %v306
  %346 = vmatprep.subr.mxu0 0.0
  %347 = vmatpush1.xpose.msra.mxu0 %v309
  %348 = vmatprep.subr.mxu0 0.0
  %349 = vmatpush1.xpose.msra.mxu0 %v312
  %350 = vmatprep.subr.mxu0 0.0
  %351 = vmatpush1.xpose.msra.mxu0 %v315
  %352 = vmatprep.subr.mxu0 0.0
  %353 = vmatpush1.xpose.msra.mxu0 %v318
  %354 = vmatprep.subr.mxu0 0.0
  %355 = vmatpush1.xpose.msra.mxu0 %v321
  %356 = vmatprep.subr.mxu0 0.0
  %357 = vmatpush1.xpose.msra.mxu0 %v324
  %358 = vmatprep.subr.mxu0 0.0
  %359 = vmatpush1.xpose.msra.mxu0 0.0
  %360 = vmatprep.subr.mxu0 0.0
  %361 = vmatpush1.xpose.msra.mxu0 0.0
  %362 = vmatprep.subr.mxu0 0.0
  %363 = vmatpush1.xpose.msra.mxu0 0.0
  %364 = vmatprep.subr.mxu0 0.0
  %365 = vmatpush1.xpose.msra.mxu0 0.0
  %366 = vmatprep.subr.mxu0 0.0
  %367 = vmatpush1.xpose.msra.mxu0 0.0
  %368 = vmatprep.subr.mxu0 0.0
  %369 = vmatpush1.xpose.msra.mxu0 0.0
  %370 = vmatprep.subr.mxu0 0.0
  %371 = vmatpush1.xpose.msra.mxu0 0.0
  %372 = vmatprep.subr.mxu0 0.0
  %373 = vmatpush1.xpose.msra.mxu0 0.0
  %374 = vmatprep.subr.mxu0 0.0
  %375 = vmatpush1.xpose.msra.mxu0 0.0
  %376 = vmatprep.subr.mxu0 0.0
  %377 = vmatpush1.xpose.msra.mxu0 0.0
  %378 = vmatprep.subr.mxu0 0.0
  %379 = vmatpush1.xpose.msra.mxu0 0.0
  %380 = vmatprep.subr.mxu0 0.0
  %381 = vmatpush1.xpose.msra.mxu0 0.0
  %382 = vmatprep.subr.mxu0 0.0
  %383 = vmatpush1.xpose.msra.mxu0 0.0
  %384 = vmatprep.subr.mxu0 0.0
  %385 = vmatpush1.xpose.msra.mxu0 0.0
  %386 = vmatprep.subr.mxu0 0.0
  %387 = vmatpush1.xpose.msra.mxu0 0.0
  %388 = vmatprep.subr.mxu0 0.0
  %389 = vmatpush1.xpose.msra.mxu0 0.0
  %390 = vmatprep.mubr.f32.mxu0 0.0
  %391 = vmatmul.mubr.f32.gmra.mrb[0].mxu0 %v276
  %v392 = vpop.f32.mrb[0].mxu0
  %v393 = vadd.f32 %v273, %v392
  %v394 = vpop.f32.mrb[0].mxu0
  %395 = vdwg.mxu0
  %v396 = vtanh.pop %v393
  %397 = vst [vmem:[%s5] sm:$0x1] %v396
  // Predicated region
  $region22: #{ttt_netx_forward.1} parent=0 // pred_check
    _
  $region23: #{ttt_netx_forward.1} parent=0 // pred_check_branch
    %399 = sbr.rel (0) target = $region25
  $region24: #{ttt_netx_forward.1} parent=0 // pred_region
    _
  $region25: #{ttt_netx_forward.1} parent=0 // pred_fallthru
    _
  // Predicated region
  $region26: #{ttt_netx_forward.1} parent=0 // pred_check
    _
  $region27: #{ttt_netx_forward.1} parent=0 // pred_check_branch
    %401 = sbr.rel (0) target = $region29
  $region28: #{ttt_netx_forward.1} parent=0 // pred_region
    _
  $region29: #{ttt_netx_forward.1} parent=0 // pred_fallthru
    _

</llo_original>
